<compile_context>
chip_gen: v5e
topology: v5e:2x2
jax: 0.10.0
libtpu: 0.0.40
codegen_flags: <defaults>
</compile_context>

<pallas_src>
import numpy as np
import jax
import jax.numpy as jnp
from jax.experimental import pallas as pl
from jax.experimental.pallas import tpu as pltpu

_TAU = 0.1                     # tau in ContrastiveLoss.contrastive_loss
_INV_TAU = 1.0 / _TAU
_EPS = 1e-9                    # nn.CosineSimilarity(dim=-1, eps=1e-9)


# ----------------------------------------------------------------------------
# Generation-aware VMEM budgets and row-tile selection
# ----------------------------------------------------------------------------
def _vmem_budgets():
    """(input-tile budget, scoped-VMEM limit) in bytes, per chip generation."""
    try:
        cap = pltpu.get_tpu_info().vmem_capacity_bytes
    except Exception:
        cap = 0
    if cap >= 96 * 1024 * 1024:            # v5e / v6e class: 128 MiB VMEM
        return 48 * 1024 * 1024, 80 * 1024 * 1024
    # v7x (64 MiB per TC) or unknown backend: stay conservative.
    return 20 * 1024 * 1024, 40 * 1024 * 1024


def _choose_tm(M, n_slots, H, itemsize, input_budget):
    """Largest 128-multiple lane tile whose double-buffered inputs fit the budget."""
    row_bytes = (n_slots + 2) * H * itemsize   # anchor (N slots) + 2 positive slots
    tm = input_budget // (2 * row_bytes)       # 2x: double-buffered input tiles
    tm = max(128, (tm // 128) * 128)
    tm = min(tm, 8192)                         # amortizes the ~0.35 us/step overhead
    if M <= 256:
        return M                               # one full-extent block (toy sizes)
    if M <= tm:
        # Cap so the grid has >= 2 steps: with dimension_semantics=("parallel",)
        # this keeps both v7x TensorCores busy (single-TC chips are unaffected).
        half = (((M + 1) // 2) + 127) // 128 * 128
        return min(tm, half)
    return tm


# ----------------------------------------------------------------------------
# Pallas kernel: contrastive noise loss over one tile of TM rows
#   layout: lanes = rows (TM), sublanes = hidden (H), leading dim = slot (N)
# ----------------------------------------------------------------------------
def _noise_loss_kernel(anc_ref, pneg_ref, ppos_ref, out_ref):
    """anc_ref : [N, H, TM]  slot 0 = origin, slots 1:N = negatives
       pneg_ref: [1, H, TM]  slot 0 of negative-sample hiddens (first "positive")
       ppos_ref: [1, H, TM]  slot 0 of positive-sample hiddens (second "positive")
       out_ref : [1, TM]     -log(sp / (sp + sn))"""
    n_slots = anc_ref.shape[0]
    o = anc_ref[0].astype(jnp.float32)                                    # [H, TM]
    # 1 / (tau * max(||origin||, eps)) -- exact sqrt / divide, no approx EUP ops.
    norm_o = jnp.maximum(jnp.sqrt(jnp.sum(o * o, axis=0, keepdims=True)), _EPS)
    inv_no_tau = _INV_TAU / norm_o                                        # [1, TM]

    def exp_sim(x):
        x = x.astype(jnp.float32)                                         # [H, TM]
        w12 = jnp.sum(o * x, axis=0, keepdims=True)                       # [1, TM]
        norm_x = jnp.maximum(jnp.sqrt(jnp.sum(x * x, axis=0, keepdims=True)), _EPS)
        return jnp.exp(w12 * inv_no_tau / norm_x)                         # exp(cos/tau)

    s_p = exp_sim(pneg_ref[0]) + exp_sim(ppos_ref[0])
    s_n = exp_sim(anc_ref[1])
    for k in range(2, n_slots):     # small static N -> unrolled; no [K,H,TM] temporary
        s_n = s_n + exp_sim(anc_ref[k])
    out_ref[...] = -jnp.log(s_p / (s_p + s_n))                            # exact


def _noise_loss_pallas(hid_anchor, hid_negative, hid_positive):
    """loss_noise over all M = B*S rows.  Inputs are [N, H, M] (rows on lanes)."""
    n_slots, H, M = hid_anchor.shape
    assert n_slots >= 2, "need at least one negative slot"
    input_budget, vmem_limit = _vmem_budgets()
    tm = _choose_tm(M, n_slots, H, hid_anchor.dtype.itemsize, input_budget)
    num_tiles = pl.cdiv(M, tm)

    out = pl.pallas_call(
        _noise_loss_kernel,
        out_shape=jax.ShapeDtypeStruct((1, M), jnp.float32),
        grid=(num_tiles,),
        in_specs=[
            pl.BlockSpec((n_slots, H, tm), lambda i: (0, 0, i)),   # full anchor tensor
            pl.BlockSpec((1, H, tm), lambda i: (0, 0, i)),         # slot 0 only (DMA'd)
            pl.BlockSpec((1, H, tm), lambda i: (0, 0, i)),         # slot 0 only (DMA'd)
        ],
        out_specs=pl.BlockSpec((1, tm), lambda i: (0, i)),         # lane-dense output
        compiler_params=pltpu.CompilerParams(
            dimension_semantics=("parallel",),
            vmem_limit_bytes=vmem_limit,
        ),
    )(hid_anchor, hid_negative, hid_positive)
    return out[0]                                                  # [M]


# ----------------------------------------------------------------------------
# Plain-JAX contrastive loss (tiny loss_seq path + reference)
# ----------------------------------------------------------------------------
def _cosine_sim_jax(a, b, eps=_EPS):
    w12 = jnp.sum(a * b, axis=-1)
    n1 = jnp.maximum(jnp.sqrt(jnp.sum(a * a, axis=-1)), eps)
    n2 = jnp.maximum(jnp.sqrt(jnp.sum(b * b, axis=-1)), eps)
    return w12 / (n1 * n2)


def contrastive_loss_jax(origin, positive, negative, tau=_TAU):
    sp = jnp.sum(jnp.exp(_cosine_sim_jax(origin, positive) / tau), axis=-1)
    sn = jnp.sum(jnp.exp(_cosine_sim_jax(origin, negative) / tau), axis=-1)
    return -jnp.log(sp / (sp + sn))


# ----------------------------------------------------------------------------
# Deterministic parameter init + DPBL surrogate (plain-JAX glue)
# ----------------------------------------------------------------------------
# TODO(synk): the DPBL encoder source is not provided in the reference; a
# deterministic linear+GELU surrogate with the same output interface (pooled
# [B, H] embedding, per-slot hidden states) is used instead.
def init_params(key, feat, n_slots, hidden):
    k1, k2, k3, k4 = jax.random.split(key, 4)
    return {
        # Stored as [N*H, F] so the encoder emits [N*H, M] with no output transpose.
        "dpbl_w": jax.random.normal(k1, (n_slots * hidden, feat), jnp.float32) * 0.1,
        "dpbl_b": jax.random.normal(k2, (n_slots * hidden,), jnp.float32) * 0.1,
        # ContrastiveLoss.output_linear1/2 + GELU exist in the PyTorch module but
        # are never used in its forward; initialized only for parameter parity.
        "cl_w1": jax.random.normal(k3, (hidden, hidden), jnp.float32) * 0.1,
        "cl_b1": jnp.zeros((hidden,), jnp.float32),
        "cl_w2": jax.random.normal(k4, (hidden, hidden), jnp.float32) * 0.1,
        "cl_b2": jnp.zeros((hidden,), jnp.float32),
    }


def dpbl_apply(params, x, n_slots, hidden):
    """Returns pooled [B, H] and hidden states in kernel layout [N, H, M], M = B*S."""
    B, S, F = x.shape
    M = B * S
    x2d = x.reshape(M, F)
    # Single dot_general produces the [N*H, M] layout directly (rows on lanes):
    # no wrapper-side transpose/pad/concat HBM round trips feeding the kernel.
    h = jax.nn.gelu(jnp.einsum("hf,mf->hm", params["dpbl_w"], x2d)
                    + params["dpbl_b"][:, None])                   # [N*H, M]
    hidden_nhm = h.reshape(n_slots, hidden, M)                     # [N, H, M]
    pooled = hidden_nhm.reshape(n_slots, hidden, B, S).mean(axis=(0, 3)).T  # [B, H]
    return pooled, hidden_nhm


# ----------------------------------------------------------------------------
# ContrastiveLearning.forward
# ----------------------------------------------------------------------------
def contrastive_learning_forward(params, data, n_slots, hidden):
    anchor, hid_anchor = dpbl_apply(params, data[0], n_slots, hidden)     # [B,H],[N,H,M]
    positive, hid_positive = dpbl_apply(params, data[1], n_slots, hidden)
    negative, hid_negative = dpbl_apply(params, data[2], n_slots, hidden)

    # loss_seq: only M = B rows with Kp = Kn = 1 -- a pallas_call here is pure
    # launch / DMA-setup overhead (perf review), so it stays in plain JAX.
    loss_seq = contrastive_loss_jax(anchor[:, None, :], positive[:, None, :],
                                    negative[:, None, :])                  # [B]

    # loss_noise (hot path, M = B*S rows):
    #   origin    = anchor slot 0
    #   positives = slot 0 of negative-sample + slot 0 of positive-sample hiddens
    #   negatives = anchor slots 1:N   (both slicings happen inside the kernel)
    B, S = data.shape[1], data.shape[2]
    loss_noise = _noise_loss_pallas(hid_anchor, hid_negative, hid_positive)  # [M]
    return loss_seq, loss_noise.reshape(B, S)


if __name__ == "__main__":
    B, S, F, N, H = 2, 8, 16, 4, 32
    key = jax.random.PRNGKey(0)
    kp, kd = jax.random.split(key)
    params = init_params(kp, F, N, H)
    data = jax.random.normal(kd, (3, B, S, F), jnp.float32)

    loss_seq, loss_noise = contrastive_learning_forward(params, data, N, H)
    jax.block_until_ready((loss_seq, loss_noise))

    # Pure-JAX reference of the PyTorch semantics, from the same DPBL surrogate.
    def to_bsnh(h_nhm):
        return jnp.transpose(h_nhm.reshape(N, H, B, S), (2, 3, 0, 1))     # [B,S,N,H]

    anchor, ha = dpbl_apply(params, data[0], N, H)
    positive, hp = dpbl_apply(params, data[1], N, H)
    negative, hn = dpbl_apply(params, data[2], N, H)
    ha4, hp4, hn4 = to_bsnh(ha), to_bsnh(hp), to_bsnh(hn)
    ref_seq = contrastive_loss_jax(anchor[:, None, :], positive[:, None, :],
                                   negative[:, None, :])
    ref_noise = contrastive_loss_jax(
        ha4[:, :, 0:1, :],
        jnp.concatenate([hn4[:, :, 0:1, :], hp4[:, :, 0:1, :]], axis=2),
        ha4[:, :, 1:, :])

    assert loss_seq.shape == (B,) and loss_noise.shape == (B, S)
    assert np.all(np.isfinite(np.asarray(loss_noise)))
    np.testing.assert_allclose(np.asarray(loss_seq), np.asarray(ref_seq),
                               rtol=2e-3, atol=2e-3)
    np.testing.assert_allclose(np.asarray(loss_noise), np.asarray(ref_noise),
                               rtol=2e-3, atol=2e-3)
    print("KERNEL_OK")
</pallas_src>

<mosaic_0001>
module attributes {stable_mosaic.version = 11 : i64} {
  func.func @_noise_loss_kernel(%arg0: i32, %arg1: memref<4x32x16xf32, #tpu.memory_space<vmem>>, %arg2: memref<1x32x16xf32, #tpu.memory_space<vmem>>, %arg3: memref<1x32x16xf32, #tpu.memory_space<vmem>>, %arg4: memref<1x16xf32, #tpu.memory_space<vmem>>) attributes {dimension_semantics = [#tpu.dimension_semantics<parallel>], iteration_bounds = array<i64: 1>, scalar_prefetch = 0 : i64, scratch_operands = 0 : i64, tpu.core_type = #tpu.core_type<tc>, window_params = [{transform_indices = @transform_0, window_bounds = array<i64: 4, 32, 16>}, {transform_indices = @transform_1, window_bounds = array<i64: 1, 32, 16>}, {transform_indices = @transform_2, window_bounds = array<i64: 1, 32, 16>}, {transform_indices = @transform_3, window_bounds = array<i64: 1, 16>}]} {
    %c0 = arith.constant 0 : index
    %c0_0 = arith.constant 0 : index
    %c0_1 = arith.constant 0 : index
    %0 = vector.load %arg1[%c0, %c0_0, %c0_1] : memref<4x32x16xf32, #tpu.memory_space<vmem>>, vector<1x32x16xf32>
    %1 = vector.shape_cast %0 : vector<1x32x16xf32> to vector<32x16xf32>
    %2 = arith.mulf %1, %1 : vector<32x16xf32>
    %cst = arith.constant dense<0.000000e+00> : vector<16xf32>
    %3 = vector.multi_reduction <add>, %2, %cst [0] : vector<32x16xf32> to vector<16xf32>
    %4 = vector.shape_cast %3 : vector<16xf32> to vector<1x16xf32>
    %5 = math.sqrt %4 : vector<1x16xf32>
    %cst_2 = arith.constant 9.99999971E-10 : f32
    %6 = vector.broadcast %cst_2 : f32 to vector<1x16xf32>
    %7 = arith.maximumf %5, %6 : vector<1x16xf32>
    %cst_3 = arith.constant 1.000000e+01 : f32
    %8 = vector.broadcast %cst_3 : f32 to vector<1x16xf32>
    %9 = arith.divf %8, %7 : vector<1x16xf32>
    %c0_4 = arith.constant 0 : index
    %c0_5 = arith.constant 0 : index
    %c0_6 = arith.constant 0 : index
    %10 = vector.load %arg2[%c0_4, %c0_5, %c0_6] : memref<1x32x16xf32, #tpu.memory_space<vmem>>, vector<1x32x16xf32>
    %11 = vector.shape_cast %10 : vector<1x32x16xf32> to vector<32x16xf32>
    %12 = arith.mulf %1, %11 : vector<32x16xf32>
    %cst_7 = arith.constant dense<0.000000e+00> : vector<16xf32>
    %13 = vector.multi_reduction <add>, %12, %cst_7 [0] : vector<32x16xf32> to vector<16xf32>
    %14 = vector.shape_cast %13 : vector<16xf32> to vector<1x16xf32>
    %15 = arith.mulf %11, %11 : vector<32x16xf32>
    %cst_8 = arith.constant dense<0.000000e+00> : vector<16xf32>
    %16 = vector.multi_reduction <add>, %15, %cst_8 [0] : vector<32x16xf32> to vector<16xf32>
    %17 = vector.shape_cast %16 : vector<16xf32> to vector<1x16xf32>
    %18 = math.sqrt %17 : vector<1x16xf32>
    %cst_9 = arith.constant 9.99999971E-10 : f32
    %19 = vector.broadcast %cst_9 : f32 to vector<1x16xf32>
    %20 = arith.maximumf %18, %19 : vector<1x16xf32>
    %21 = arith.mulf %14, %9 : vector<1x16xf32>
    %22 = arith.divf %21, %20 : vector<1x16xf32>
    %23 = math.exp %22 : vector<1x16xf32>
    %c0_10 = arith.constant 0 : index
    %c0_11 = arith.constant 0 : index
    %c0_12 = arith.constant 0 : index
    %24 = vector.load %arg3[%c0_10, %c0_11, %c0_12] : memref<1x32x16xf32, #tpu.memory_space<vmem>>, vector<1x32x16xf32>
    %25 = vector.shape_cast %24 : vector<1x32x16xf32> to vector<32x16xf32>
    %26 = arith.mulf %1, %25 : vector<32x16xf32>
    %cst_13 = arith.constant dense<0.000000e+00> : vector<16xf32>
    %27 = vector.multi_reduction <add>, %26, %cst_13 [0] : vector<32x16xf32> to vector<16xf32>
    %28 = vector.shape_cast %27 : vector<16xf32> to vector<1x16xf32>
    %29 = arith.mulf %25, %25 : vector<32x16xf32>
    %cst_14 = arith.constant dense<0.000000e+00> : vector<16xf32>
    %30 = vector.multi_reduction <add>, %29, %cst_14 [0] : vector<32x16xf32> to vector<16xf32>
    %31 = vector.shape_cast %30 : vector<16xf32> to vector<1x16xf32>
    %32 = math.sqrt %31 : vector<1x16xf32>
    %cst_15 = arith.constant 9.99999971E-10 : f32
    %33 = vector.broadcast %cst_15 : f32 to vector<1x16xf32>
    %34 = arith.maximumf %32, %33 : vector<1x16xf32>
    %35 = arith.mulf %28, %9 : vector<1x16xf32>
    %36 = arith.divf %35, %34 : vector<1x16xf32>
    %37 = math.exp %36 : vector<1x16xf32>
    %38 = arith.addf %23, %37 : vector<1x16xf32>
    %c1 = arith.constant 1 : index
    %c0_16 = arith.constant 0 : index
    %c0_17 = arith.constant 0 : index
    %39 = vector.load %arg1[%c1, %c0_16, %c0_17] : memref<4x32x16xf32, #tpu.memory_space<vmem>>, vector<1x32x16xf32>
    %40 = vector.shape_cast %39 : vector<1x32x16xf32> to vector<32x16xf32>
    %41 = arith.mulf %1, %40 : vector<32x16xf32>
    %cst_18 = arith.constant dense<0.000000e+00> : vector<16xf32>
    %42 = vector.multi_reduction <add>, %41, %cst_18 [0] : vector<32x16xf32> to vector<16xf32>
    %43 = vector.shape_cast %42 : vector<16xf32> to vector<1x16xf32>
    %44 = arith.mulf %40, %40 : vector<32x16xf32>
    %cst_19 = arith.constant dense<0.000000e+00> : vector<16xf32>
    %45 = vector.multi_reduction <add>, %44, %cst_19 [0] : vector<32x16xf32> to vector<16xf32>
    %46 = vector.shape_cast %45 : vector<16xf32> to vector<1x16xf32>
    %47 = math.sqrt %46 : vector<1x16xf32>
    %cst_20 = arith.constant 9.99999971E-10 : f32
    %48 = vector.broadcast %cst_20 : f32 to vector<1x16xf32>
    %49 = arith.maximumf %47, %48 : vector<1x16xf32>
    %50 = arith.mulf %43, %9 : vector<1x16xf32>
    %51 = arith.divf %50, %49 : vector<1x16xf32>
    %52 = math.exp %51 : vector<1x16xf32>
    %c2 = arith.constant 2 : index
    %c0_21 = arith.constant 0 : index
    %c0_22 = arith.constant 0 : index
    %53 = vector.load %arg1[%c2, %c0_21, %c0_22] : memref<4x32x16xf32, #tpu.memory_space<vmem>>, vector<1x32x16xf32>
    %54 = vector.shape_cast %53 : vector<1x32x16xf32> to vector<32x16xf32>
    %55 = arith.mulf %1, %54 : vector<32x16xf32>
    %cst_23 = arith.constant dense<0.000000e+00> : vector<16xf32>
    %56 = vector.multi_reduction <add>, %55, %cst_23 [0] : vector<32x16xf32> to vector<16xf32>
    %57 = vector.shape_cast %56 : vector<16xf32> to vector<1x16xf32>
    %58 = arith.mulf %54, %54 : vector<32x16xf32>
    %cst_24 = arith.constant dense<0.000000e+00> : vector<16xf32>
    %59 = vector.multi_reduction <add>, %58, %cst_24 [0] : vector<32x16xf32> to vector<16xf32>
    %60 = vector.shape_cast %59 : vector<16xf32> to vector<1x16xf32>
    %61 = math.sqrt %60 : vector<1x16xf32>
    %cst_25 = arith.constant 9.99999971E-10 : f32
    %62 = vector.broadcast %cst_25 : f32 to vector<1x16xf32>
    %63 = arith.maximumf %61, %62 : vector<1x16xf32>
    %64 = arith.mulf %57, %9 : vector<1x16xf32>
    %65 = arith.divf %64, %63 : vector<1x16xf32>
    %66 = math.exp %65 : vector<1x16xf32>
    %67 = arith.addf %52, %66 : vector<1x16xf32>
    %c3 = arith.constant 3 : index
    %c0_26 = arith.constant 0 : index
    %c0_27 = arith.constant 0 : index
    %68 = vector.load %arg1[%c3, %c0_26, %c0_27] : memref<4x32x16xf32, #tpu.memory_space<vmem>>, vector<1x32x16xf32>
    %69 = vector.shape_cast %68 : vector<1x32x16xf32> to vector<32x16xf32>
    %70 = arith.mulf %1, %69 : vector<32x16xf32>
    %cst_28 = arith.constant dense<0.000000e+00> : vector<16xf32>
    %71 = vector.multi_reduction <add>, %70, %cst_28 [0] : vector<32x16xf32> to vector<16xf32>
    %72 = vector.shape_cast %71 : vector<16xf32> to vector<1x16xf32>
    %73 = arith.mulf %69, %69 : vector<32x16xf32>
    %cst_29 = arith.constant dense<0.000000e+00> : vector<16xf32>
    %74 = vector.multi_reduction <add>, %73, %cst_29 [0] : vector<32x16xf32> to vector<16xf32>
    %75 = vector.shape_cast %74 : vector<16xf32> to vector<1x16xf32>
    %76 = math.sqrt %75 : vector<1x16xf32>
    %cst_30 = arith.constant 9.99999971E-10 : f32
    %77 = vector.broadcast %cst_30 : f32 to vector<1x16xf32>
    %78 = arith.maximumf %76, %77 : vector<1x16xf32>
    %79 = arith.mulf %72, %9 : vector<1x16xf32>
    %80 = arith.divf %79, %78 : vector<1x16xf32>
    %81 = math.exp %80 : vector<1x16xf32>
    %82 = arith.addf %67, %81 : vector<1x16xf32>
    %83 = arith.addf %38, %82 : vector<1x16xf32>
    %84 = arith.divf %38, %83 : vector<1x16xf32>
    %85 = math.log %84 : vector<1x16xf32>
    %cst_31 = arith.constant 0.000000e+00 : f32
    %86 = vector.broadcast %cst_31 : f32 to vector<1x16xf32>
    %87 = arith.subf %86, %85 : vector<1x16xf32>
    %c0_32 = arith.constant 0 : index
    %c0_33 = arith.constant 0 : index
    %88 = vector.load %arg4[%c0_32, %c0_33] : memref<1x16xf32, #tpu.memory_space<vmem>>, vector<1x16xf32>
    tpu.vector_store %arg4[%c0_32, %c0_33], %87 {strides = array<i32>} : memref<1x16xf32, #tpu.memory_space<vmem>>, vector<1x16xf32>,
    return
  }
  func.func @transform_0(%arg0: i32) -> (i32, i32, i32) {
    %c0_i32 = arith.constant 0 : i32
    %c0_i32_0 = arith.constant 0 : i32
    %c0_i32_1 = arith.constant 0 : i32
    return %c0_i32, %c0_i32_0, %arg0 : i32, i32, i32
  }
  func.func @transform_1(%arg0: i32) -> (i32, i32, i32) {
    %c0_i32 = arith.constant 0 : i32
    %c0_i32_0 = arith.constant 0 : i32
    %c0_i32_1 = arith.constant 0 : i32
    return %c0_i32, %c0_i32_0, %arg0 : i32, i32, i32
  }
  func.func @transform_2(%arg0: i32) -> (i32, i32, i32) {
    %c0_i32 = arith.constant 0 : i32
    %c0_i32_0 = arith.constant 0 : i32
    %c0_i32_1 = arith.constant 0 : i32
    return %c0_i32, %c0_i32_0, %arg0 : i32, i32, i32
  }
  func.func @transform_3(%arg0: i32) -> (i32, i32) {
    %c0_i32 = arith.constant 0 : i32
    %c0_i32_0 = arith.constant 0 : i32
    return %c0_i32, %arg0 : i32, i32
  }
}

</mosaic_0001>

<llo_original>
// kernel: tpu_custom_call.1
$region0: #{tpu_custom_call.1}
  #allocation0 [shape = 'u32[]', space=smem, size = 0x4, offset = 0x4, fixed_abs, tag = 'smem constant byte address 0x4 - core index']
  #allocation1 [shape = 'u32[72,128]{1,0:T(1,128)}', space=vmem, size = 0x9000, scoped, tag = 'internal scratch']
  %s0 = inlined_call_operand.vmem [shape: f32[4,32,16], index: 0, kind: input, shape index: {}]
  %s1 = inlined_call_operand.vmem [shape: f32[4,32,16], index: 1, kind: input, shape index: {}]
  %s2 = inlined_call_operand.vmem [shape: f32[4,32,16], index: 2, kind: input, shape index: {}]
  %s3 = inlined_call_operand.hbm [shape: f32[1,16], index: 3, kind: output, shape index: {}]
  %s4 = sld [smem:[#allocation0]]
  $region22: #{tpu_custom_call.1} parent=0
    _
  %s6 = ssub.s32 1, %s4
  %s7 = scalar_select 0, %s6, %s4
  $region1: #{tpu_custom_call.1} parent=0
    #allocation2 [shape = 'u8[512]{0}', space=vmem, size = 0x400, scoped, tag = 'output window, operand 0, single buffered']
    #allocation3 [shape = 's32[1]{0}', space=sflag, size = 0x4, scoped, tag = 'scoped memory for tpu_custom_call.1']
    %8 = vsyncpa [#allocation3], 0
    // Predicated region
    $region2: #{tpu_custom_call.1} parent=1 // pred_check
      _
    $region3: #{tpu_custom_call.1} parent=1 // pred_check_branch
      %10 = sbr.rel (0) target = $region5
    $region4: #{tpu_custom_call.1} parent=1 // pred_region
      _
    $region5: #{tpu_custom_call.1} parent=1 // pred_fallthru
      _
    // Predicated region
    $region6: #{tpu_custom_call.1} parent=1 // pred_check
      _
    $region7: #{tpu_custom_call.1} parent=1 // pred_check_branch
      %12 = sbr.rel (0) target = $region9
    $region8: #{tpu_custom_call.1} parent=1 // pred_region
      _
    $region9: #{tpu_custom_call.1} parent=1 // pred_fallthru
      _
    // Predicated region
    $region10: #{tpu_custom_call.1} parent=1 // pred_check
      _
    $region11: #{tpu_custom_call.1} parent=1 // pred_check_branch
      %14 = sbr.rel (0) target = $region13
    $region12: #{tpu_custom_call.1} parent=1 // pred_region
      _
    $region13: #{tpu_custom_call.1} parent=1 // pred_fallthru
      _
    %v15 = vld [vmem:[%s0] sm:$0xff]
    %v16 = vld [vmem:[%s0 + $0x8] sm:$0xff]
    %v17 = vld [vmem:[%s0 + $0x10] sm:$0xff]
    %v18 = vld [vmem:[%s0 + $0x18] sm:$0xff]
    %v19 = vmul.f32 %v15, %v15
    %v20 = vmul.f32 %v16, %v16
    %v21 = vmul.f32 %v17, %v17
    %v22 = vmul.f32 %v18, %v18
    %vm23 = vcmask 130048
    %v24 = vsel %vm23, %v19, 0.0
    %v25 = vsel %vm23, %v20, 0.0
    %v26 = vadd.f32 %v24, %v25
    %v27 = vsel %vm23, %v21, 0.0
    %v28 = vadd.f32 %v26, %v27
    %v29 = vsel %vm23, %v22, 0.0
    %v30 = vadd.f32 %v28, %v29
    %v31 = vrot.slane %v30, 4
    %v32 = vadd.f32 %v30, %v31
    %v33 = vrot.slane %v32, 2
    %v34 = vadd.f32 %v32, %v33
    %v35 = vrot.slane %v34, 1
    %v36 = vadd.f32 %v34, %v35
    %v37 = vrsqrt.pop %v36
    %v38 = vmul.f32 %v37, %v36
    %v39 = vmul.f32 %v38, %v37
    %v40 = vmul.f32 0.5, %v39
    %v41 = vsub.f32 1.5, %v40
    %v42 = vmul.f32 %v37, %v41
    %v43 = vmul.f32 %v36, %v42
    %vm44 = vcmp.eq.f32.partialorder %v36, inf
    %v45 = vsel %vm44, %v36, %v43
    %vm46 = vcmp.eq.f32.partialorder %v36, 0.0
    %v47 = vand.u32 %v36, 2147483648
    %v48 = vsel %vm46, %v47, %v45
    %v49 = vmax.f32 %v48, 1e-09
    %v50 = vrcp.pop %v49
    %v51 = vmul.f32 %v49, %v50
    %v52 = vsub.f32 1.0, %v51
    %v53 = vmul.f32 %v50, %v52
    %v54 = vadd.f32 %v50, %v53
    %vm55 = vweird.f32 %v49
    %vm56 = vweird.f32 %v50
    %vm57 = vmor %vm55, %vm56
    %v58 = vsel %vm57, %v50, %v54
    %v59 = vand.u32 2147483647, %v49
    %vm60 = vcmp.eq.f32.partialorder %v59, 8.507059e+37
    %v61 = vand.u32 %v49, 2147483648
    %v62 = vor.u32 1.1754944e-38, %v61
    %v63 = vsel %vm60, %v62, %v58
    %v64 = vmul.f32 10.0, %v63
    %v65 = vld [vmem:[%s1] sm:$0xff]
    %v66 = vld [vmem:[%s1 + $0x8] sm:$0xff]
    %v67 = vld [vmem:[%s1 + $0x10] sm:$0xff]
    %v68 = vld [vmem:[%s1 + $0x18] sm:$0xff]
    %v69 = vmul.f32 %v15, %v65
    %v70 = vmul.f32 %v16, %v66
    %v71 = vmul.f32 %v17, %v67
    %v72 = vmul.f32 %v18, %v68
    %v73 = vsel %vm23, %v69, 0.0
    %v74 = vsel %vm23, %v70, 0.0
    %v75 = vadd.f32 %v73, %v74
    %v76 = vsel %vm23, %v71, 0.0
    %v77 = vadd.f32 %v75, %v76
    %v78 = vsel %vm23, %v72, 0.0
    %v79 = vadd.f32 %v77, %v78
    %v80 = vrot.slane %v79, 4
    %v81 = vadd.f32 %v79, %v80
    %v82 = vrot.slane %v81, 2
    %v83 = vadd.f32 %v81, %v82
    %v84 = vrot.slane %v83, 1
    %v85 = vadd.f32 %v83, %v84
    %v86 = vmul.f32 %v65, %v65
    %v87 = vmul.f32 %v66, %v66
    %v88 = vmul.f32 %v67, %v67
    %v89 = vmul.f32 %v68, %v68
    %v90 = vsel %vm23, %v86, 0.0
    %v91 = vsel %vm23, %v87, 0.0
    %v92 = vadd.f32 %v90, %v91
    %v93 = vsel %vm23, %v88, 0.0
    %v94 = vadd.f32 %v92, %v93
    %v95 = vsel %vm23, %v89, 0.0
    %v96 = vadd.f32 %v94, %v95
    %v97 = vrot.slane %v96, 4
    %v98 = vadd.f32 %v96, %v97
    %v99 = vrot.slane %v98, 2
    %v100 = vadd.f32 %v98, %v99
    %v101 = vrot.slane %v100, 1
    %v102 = vadd.f32 %v100, %v101
    %v103 = vrsqrt.pop %v102
    %v104 = vmul.f32 %v103, %v102
    %v105 = vmul.f32 %v104, %v103
    %v106 = vmul.f32 0.5, %v105
    %v107 = vsub.f32 1.5, %v106
    %v108 = vmul.f32 %v103, %v107
    %v109 = vmul.f32 %v102, %v108
    %vm110 = vcmp.eq.f32.partialorder %v102, inf
    %v111 = vsel %vm110, %v102, %v109
    %vm112 = vcmp.eq.f32.partialorder %v102, 0.0
    %v113 = vand.u32 %v102, 2147483648
    %v114 = vsel %vm112, %v113, %v111
    %v115 = vmax.f32 %v114, 1e-09
    %v116 = vmul.f32 %v85, %v64
    %v117 = vrcp.pop %v115
    %v118 = vmul.f32 %v115, %v117
    %v119 = vsub.f32 1.0, %v118
    %v120 = vmul.f32 %v117, %v119
    %v121 = vadd.f32 %v117, %v120
    %vm122 = vweird.f32 %v115
    %vm123 = vweird.f32 %v117
    %vm124 = vmor %vm122, %vm123
    %v125 = vsel %vm124, %v117, %v121
    %v126 = vand.u32 2147483647, %v115
    %vm127 = vcmp.eq.f32.partialorder %v126, 8.507059e+37
    %v128 = vand.u32 %v115, 2147483648
    %v129 = vor.u32 1.1754944e-38, %v128
    %v130 = vsel %vm127, %v129, %v125
    %v131 = vmul.f32 %v116, %v130
    %v132 = vmul.f32 %v131, 1.442695
    %v133 = vpow.pop %v132
    %v134 = vld [vmem:[%s2] sm:$0xff]
    %v135 = vld [vmem:[%s2 + $0x8] sm:$0xff]
    %v136 = vld [vmem:[%s2 + $0x10] sm:$0xff]
    %v137 = vld [vmem:[%s2 + $0x18] sm:$0xff]
    %v138 = vmul.f32 %v15, %v134
    %v139 = vmul.f32 %v16, %v135
    %v140 = vmul.f32 %v17, %v136
    %v141 = vmul.f32 %v18, %v137
    %v142 = vsel %vm23, %v138, 0.0
    %v143 = vsel %vm23, %v139, 0.0
    %v144 = vadd.f32 %v142, %v143
    %v145 = vsel %vm23, %v140, 0.0
    %v146 = vadd.f32 %v144, %v145
    %v147 = vsel %vm23, %v141, 0.0
    %v148 = vadd.f32 %v146, %v147
    %v149 = vrot.slane %v148, 4
    %v150 = vadd.f32 %v148, %v149
    %v151 = vrot.slane %v150, 2
    %v152 = vadd.f32 %v150, %v151
    %v153 = vrot.slane %v152, 1
    %v154 = vadd.f32 %v152, %v153
    %v155 = vmul.f32 %v134, %v134
    %v156 = vmul.f32 %v135, %v135
    %v157 = vmul.f32 %v136, %v136
    %v158 = vmul.f32 %v137, %v137
    %v159 = vsel %vm23, %v155, 0.0
    %v160 = vsel %vm23, %v156, 0.0
    %v161 = vadd.f32 %v159, %v160
    %v162 = vsel %vm23, %v157, 0.0
    %v163 = vadd.f32 %v161, %v162
    %v164 = vsel %vm23, %v158, 0.0
    %v165 = vadd.f32 %v163, %v164
    %v166 = vrot.slane %v165, 4
    %v167 = vadd.f32 %v165, %v166
    %v168 = vrot.slane %v167, 2
    %v169 = vadd.f32 %v167, %v168
    %v170 = vrot.slane %v169, 1
    %v171 = vadd.f32 %v169, %v170
    %v172 = vrsqrt.pop %v171
    %v173 = vmul.f32 %v172, %v171
    %v174 = vmul.f32 %v173, %v172
    %v175 = vmul.f32 0.5, %v174
    %v176 = vsub.f32 1.5, %v175
    %v177 = vmul.f32 %v172, %v176
    %v178 = vmul.f32 %v171, %v177
    %vm179 = vcmp.eq.f32.partialorder %v171, inf
    %v180 = vsel %vm179, %v171, %v178
    %vm181 = vcmp.eq.f32.partialorder %v171, 0.0
    %v182 = vand.u32 %v171, 2147483648
    %v183 = vsel %vm181, %v182, %v180
    %v184 = vmax.f32 %v183, 1e-09
    %v185 = vmul.f32 %v154, %v64
    %v186 = vrcp.pop %v184
    %v187 = vmul.f32 %v184, %v186
    %v188 = vsub.f32 1.0, %v187
    %v189 = vmul.f32 %v186, %v188
    %v190 = vadd.f32 %v186, %v189
    %vm191 = vweird.f32 %v184
    %vm192 = vweird.f32 %v186
    %vm193 = vmor %vm191, %vm192
    %v194 = vsel %vm193, %v186, %v190
    %v195 = vand.u32 2147483647, %v184
    %vm196 = vcmp.eq.f32.partialorder %v195, 8.507059e+37
    %v197 = vand.u32 %v184, 2147483648
    %v198 = vor.u32 1.1754944e-38, %v197
    %v199 = vsel %vm196, %v198, %v194
    %v200 = vmul.f32 %v185, %v199
    %v201 = vmul.f32 %v200, 1.442695
    %v202 = vpow.pop %v201
    %v203 = vadd.f32 %v133, %v202
    %s204 = scalar_lea.vmem %s0, 32
    %v205 = vld [vmem:[%s204] sm:$0xff]
    %v206 = vld [vmem:[%s204 + $0x8] sm:$0xff]
    %v207 = vld [vmem:[%s204 + $0x10] sm:$0xff]
    %v208 = vld [vmem:[%s204 + $0x18] sm:$0xff]
    %v209 = vmul.f32 %v15, %v205
    %v210 = vmul.f32 %v16, %v206
    %v211 = vmul.f32 %v17, %v207
    %v212 = vmul.f32 %v18, %v208
    %v213 = vsel %vm23, %v209, 0.0
    %v214 = vsel %vm23, %v210, 0.0
    %v215 = vadd.f32 %v213, %v214
    %v216 = vsel %vm23, %v211, 0.0
    %v217 = vadd.f32 %v215, %v216
    %v218 = vsel %vm23, %v212, 0.0
    %v219 = vadd.f32 %v217, %v218
    %v220 = vrot.slane %v219, 4
    %v221 = vadd.f32 %v219, %v220
    %v222 = vrot.slane %v221, 2
    %v223 = vadd.f32 %v221, %v222
    %v224 = vrot.slane %v223, 1
    %v225 = vadd.f32 %v223, %v224
    %v226 = vmul.f32 %v205, %v205
    %v227 = vmul.f32 %v206, %v206
    %v228 = vmul.f32 %v207, %v207
    %v229 = vmul.f32 %v208, %v208
    %v230 = vsel %vm23, %v226, 0.0
    %v231 = vsel %vm23, %v227, 0.0
    %v232 = vadd.f32 %v230, %v231
    %v233 = vsel %vm23, %v228, 0.0
    %v234 = vadd.f32 %v232, %v233
    %v235 = vsel %vm23, %v229, 0.0
    %v236 = vadd.f32 %v234, %v235
    %v237 = vrot.slane %v236, 4
    %v238 = vadd.f32 %v236, %v237
    %v239 = vrot.slane %v238, 2
    %v240 = vadd.f32 %v238, %v239
    %v241 = vrot.slane %v240, 1
    %v242 = vadd.f32 %v240, %v241
    %v243 = vrsqrt.pop %v242
    %v244 = vmul.f32 %v243, %v242
    %v245 = vmul.f32 %v244, %v243
    %v246 = vmul.f32 0.5, %v245
    %v247 = vsub.f32 1.5, %v246
    %v248 = vmul.f32 %v243, %v247
    %v249 = vmul.f32 %v242, %v248
    %vm250 = vcmp.eq.f32.partialorder %v242, inf
    %v251 = vsel %vm250, %v242, %v249
    %vm252 = vcmp.eq.f32.partialorder %v242, 0.0
    %v253 = vand.u32 %v242, 2147483648
    %v254 = vsel %vm252, %v253, %v251
    %v255 = vmax.f32 %v254, 1e-09
    %v256 = vmul.f32 %v225, %v64
    %v257 = vrcp.pop %v255
    %v258 = vmul.f32 %v255, %v257
    %v259 = vsub.f32 1.0, %v258
    %v260 = vmul.f32 %v257, %v259
    %v261 = vadd.f32 %v257, %v260
    %vm262 = vweird.f32 %v255
    %vm263 = vweird.f32 %v257
    %vm264 = vmor %vm262, %vm263
    %v265 = vsel %vm264, %v257, %v261
    %v266 = vand.u32 2147483647, %v255
    %vm267 = vcmp.eq.f32.partialorder %v266, 8.507059e+37
    %v268 = vand.u32 %v255, 2147483648
    %v269 = vor.u32 1.1754944e-38, %v268
    %v270 = vsel %vm267, %v269, %v265
    %v271 = vmul.f32 %v256, %v270
    %v272 = vmul.f32 %v271, 1.442695
    %v273 = vpow.pop %v272
    %s274 = scalar_lea.vmem %s0, 64
    %v275 = vld [vmem:[%s274] sm:$0xff]
    %v276 = vld [vmem:[%s274 + $0x8] sm:$0xff]
    %v277 = vld [vmem:[%s274 + $0x10] sm:$0xff]
    %v278 = vld [vmem:[%s274 + $0x18] sm:$0xff]
    %v279 = vmul.f32 %v15, %v275
    %v280 = vmul.f32 %v16, %v276
    %v281 = vmul.f32 %v17, %v277
    %v282 = vmul.f32 %v18, %v278
    %v283 = vsel %vm23, %v279, 0.0
    %v284 = vsel %vm23, %v280, 0.0
    %v285 = vadd.f32 %v283, %v284
    %v286 = vsel %vm23, %v281, 0.0
    %v287 = vadd.f32 %v285, %v286
    %v288 = vsel %vm23, %v282, 0.0
    %v289 = vadd.f32 %v287, %v288
    %v290 = vrot.slane %v289, 4
    %v291 = vadd.f32 %v289, %v290
    %v292 = vrot.slane %v291, 2
    %v293 = vadd.f32 %v291, %v292
    %v294 = vrot.slane %v293, 1
    %v295 = vadd.f32 %v293, %v294
    %v296 = vmul.f32 %v275, %v275
    %v297 = vmul.f32 %v276, %v276
    %v298 = vmul.f32 %v277, %v277
    %v299 = vmul.f32 %v278, %v278
    %v300 = vsel %vm23, %v296, 0.0
    %v301 = vsel %vm23, %v297, 0.0
    %v302 = vadd.f32 %v300, %v301
    %v303 = vsel %vm23, %v298, 0.0
    %v304 = vadd.f32 %v302, %v303
    %v305 = vsel %vm23, %v299, 0.0
    %v306 = vadd.f32 %v304, %v305
    %v307 = vrot.slane %v306, 4
    %v308 = vadd.f32 %v306, %v307
    %v309 = vrot.slane %v308, 2
    %v310 = vadd.f32 %v308, %v309
    %v311 = vrot.slane %v310, 1
    %v312 = vadd.f32 %v310, %v311
    %v313 = vrsqrt.pop %v312
    %v314 = vmul.f32 %v313, %v312
    %v315 = vmul.f32 %v314, %v313
    %v316 = vmul.f32 0.5, %v315
    %v317 = vsub.f32 1.5, %v316
    %v318 = vmul.f32 %v313, %v317
    %v319 = vmul.f32 %v312, %v318
    %vm320 = vcmp.eq.f32.partialorder %v312, inf
    %v321 = vsel %vm320, %v312, %v319
    %vm322 = vcmp.eq.f32.partialorder %v312, 0.0
    %v323 = vand.u32 %v312, 2147483648
    %v324 = vsel %vm322, %v323, %v321
    %v325 = vmax.f32 %v324, 1e-09
    %v326 = vmul.f32 %v295, %v64
    %v327 = vrcp.pop %v325
    %v328 = vmul.f32 %v325, %v327
    %v329 = vsub.f32 1.0, %v328
    %v330 = vmul.f32 %v327, %v329
    %v331 = vadd.f32 %v327, %v330
    %vm332 = vweird.f32 %v325
    %vm333 = vweird.f32 %v327
    %vm334 = vmor %vm332, %vm333
    %v335 = vsel %vm334, %v327, %v331
    %v336 = vand.u32 2147483647, %v325
    %vm337 = vcmp.eq.f32.partialorder %v336, 8.507059e+37
    %v338 = vand.u32 %v325, 2147483648
    %v339 = vor.u32 1.1754944e-38, %v338
    %v340 = vsel %vm337, %v339, %v335
    %v341 = vmul.f32 %v326, %v340
    %v342 = vmul.f32 %v341, 1.442695
    %v343 = vpow.pop %v342
    %v344 = vadd.f32 %v273, %v343
    %s345 = scalar_lea.vmem %s0, 96
    %v346 = vld [vmem:[%s345] sm:$0xff]
    %v347 = vld [vmem:[%s345 + $0x8] sm:$0xff]
    %v348 = vld [vmem:[%s345 + $0x10] sm:$0xff]
    %v349 = vld [vmem:[%s345 + $0x18] sm:$0xff]
    %v350 = vmul.f32 %v15, %v346
    %v351 = vmul.f32 %v16, %v347
    %v352 = vmul.f32 %v17, %v348
    %v353 = vmul.f32 %v18, %v349
    %v354 = vsel %vm23, %v350, 0.0
    %v355 = vsel %vm23, %v351, 0.0
    %v356 = vadd.f32 %v354, %v355
    %v357 = vsel %vm23, %v352, 0.0
    %v358 = vadd.f32 %v356, %v357
    %v359 = vsel %vm23, %v353, 0.0
    %v360 = vadd.f32 %v358, %v359
    %v361 = vrot.slane %v360, 4
    %v362 = vadd.f32 %v360, %v361
    %v363 = vrot.slane %v362, 2
    %v364 = vadd.f32 %v362, %v363
    %v365 = vrot.slane %v364, 1
    %v366 = vadd.f32 %v364, %v365
    %v367 = vmul.f32 %v346, %v346
    %v368 = vmul.f32 %v347, %v347
    %v369 = vmul.f32 %v348, %v348
    %v370 = vmul.f32 %v349, %v349
    %v371 = vsel %vm23, %v367, 0.0
    %v372 = vsel %vm23, %v368, 0.0
    %v373 = vadd.f32 %v371, %v372
    %v374 = vsel %vm23, %v369, 0.0
    %v375 = vadd.f32 %v373, %v374
    %v376 = vsel %vm23, %v370, 0.0
    %v377 = vadd.f32 %v375, %v376
    %v378 = vrot.slane %v377, 4
    %v379 = vadd.f32 %v377, %v378
    %v380 = vrot.slane %v379, 2
    %v381 = vadd.f32 %v379, %v380
    %v382 = vrot.slane %v381, 1
    %v383 = vadd.f32 %v381, %v382
    %v384 = vrsqrt.pop %v383
    %v385 = vmul.f32 %v384, %v383
    %v386 = vmul.f32 %v385, %v384
    %v387 = vmul.f32 0.5, %v386
    %v388 = vsub.f32 1.5, %v387
    %v389 = vmul.f32 %v384, %v388
    %v390 = vmul.f32 %v383, %v389
    %vm391 = vcmp.eq.f32.partialorder %v383, inf
    %v392 = vsel %vm391, %v383, %v390
    %vm393 = vcmp.eq.f32.partialorder %v383, 0.0
    %v394 = vand.u32 %v383, 2147483648
    %v395 = vsel %vm393, %v394, %v392
    %v396 = vmax.f32 %v395, 1e-09
    %v397 = vmul.f32 %v366, %v64
    %v398 = vrcp.pop %v396
    %v399 = vmul.f32 %v396, %v398
    %v400 = vsub.f32 1.0, %v399
    %v401 = vmul.f32 %v398, %v400
    %v402 = vadd.f32 %v398, %v401
    %vm403 = vweird.f32 %v396
    %vm404 = vweird.f32 %v398
    %vm405 = vmor %vm403, %vm404
    %v406 = vsel %vm405, %v398, %v402
    %v407 = vand.u32 2147483647, %v396
    %vm408 = vcmp.eq.f32.partialorder %v407, 8.507059e+37
    %v409 = vand.u32 %v396, 2147483648
    %v410 = vor.u32 1.1754944e-38, %v409
    %v411 = vsel %vm408, %v410, %v406
    %v412 = vmul.f32 %v397, %v411
    %v413 = vmul.f32 %v412, 1.442695
    %v414 = vpow.pop %v413
    %v415 = vadd.f32 %v344, %v414
    %v416 = vadd.f32 %v203, %v415
    %v417 = vrcp.pop %v416
    %v418 = vmul.f32 %v416, %v417
    %v419 = vsub.f32 1.0, %v418
    %v420 = vmul.f32 %v417, %v419
    %v421 = vadd.f32 %v417, %v420
    %vm422 = vweird.f32 %v416
    %vm423 = vweird.f32 %v417
    %vm424 = vmor %vm422, %vm423
    %v425 = vsel %vm424, %v417, %v421
    %v426 = vand.u32 2147483647, %v416
    %vm427 = vcmp.eq.f32.partialorder %v426, 8.507059e+37
    %v428 = vand.u32 %v416, 2147483648
    %v429 = vor.u32 1.1754944e-38, %v428
    %v430 = vsel %vm427, %v429, %v425
    %v431 = vmul.f32 %v203, %v430
    %v432 = vlog2.pop %v431
    %v433 = vmul.f32 %v432, 0.6931472
    %v434 = vsub.f32 0.0, %v433
    %vm435 = vcmask 122880
    %436 = vst.msk [vmem:[#allocation2] sm:$0x1] %vm435, %v434
    // Predicated region
    $region14: #{tpu_custom_call.1} parent=1 // pred_check
      _
    $region15: #{tpu_custom_call.1} parent=1 // pred_check_branch
      %438 = sbr.rel (0) target = $region17
    $region16: #{tpu_custom_call.1} parent=1 // pred_region
      %440 = vsyncadd [#allocation3], 0
      %s442 = sshll.u32 [#allocation2], 4
      %s443 = int_to_ptr.vmem [resolvable:$true] %s442
      %s444 = sshll.u32 %s3, 4
      %s445 = int_to_ptr.hbm [resolvable:$true] %s444
      %447 = dma.vmem_to_hbm [thread:$0]  %s443, 16, %s445, [#allocation3]
    $region17: #{tpu_custom_call.1} parent=1 // pred_fallthru
      _
    // Predicated region
    $region18: #{tpu_custom_call.1} parent=1 // pred_check
      _
    $region19: #{tpu_custom_call.1} parent=1 // pred_check_branch
      %449 = sbr.rel (0) target = $region21
    $region20: #{tpu_custom_call.1} parent=1 // pred_region
      %451 = dma.done [#allocation3], 16
    $region21: #{tpu_custom_call.1} parent=1 // pred_fallthru
      _
    %452 = vsyncpa [#allocation3], 1

</llo_original>
